<compile_context>
chip_gen: v6e
topology: v6e:2x2x1
jax: 0.10.0
libtpu: 0.0.40
codegen_flags: <defaults>
</compile_context>

<pallas_src>
import jax
import jax.numpy as jnp
from jax import lax
from jax.experimental import pallas as pl
from jax.experimental.pallas import tpu as pltpu

EPS = 1e-8          # F.cosine_similarity default eps
BP = 8              # per-image padded batch rows (f32 sublane multiple)
MP = 2 * BP         # rows of the fused (image_0 ++ image_1) batch

CLIP_MEAN = jnp.array([0.48145466, 0.4578275, 0.40821073], dtype=jnp.float32)
CLIP_STD = jnp.array([0.26862954, 0.26130258, 0.27577711], dtype=jnp.float32)


def _pick_tk(f_dim, d_out, max_tile_bytes=6 * 1024 * 1024):
    """Largest multiple-of-128 divisor of f_dim whose bf16 W' tile fits budget.

    At real CLIP dims (F_dim = 150528 = 1176*128, D = 768) this returns
    tk = 3584 -> 5.25 MB per W' tile (10.5 MB double-buffered), well inside
    every generation's scoped-VMEM default while being large enough that the
    HBM stream, not per-grid-step overhead, dominates.
    """
    best = None
    for tk in range(128, f_dim + 1, 128):
        if f_dim % tk == 0 and tk * d_out * 2 <= max_tile_bytes:
            best = tk
    return best if best is not None else f_dim  # small case: single full tile


# ---------------------------------------------------------------------------
# Kernel: K-tiled image encoder + fused text-encode / L2-norm / similarities
# ---------------------------------------------------------------------------
def clip_similarity_kernel(x_ref, w_ref, b_ref, tokp_ref, wp_ref,
                           out_ref, acc_ref):
    # Grid: (K_steps,) -- "arbitrary" reduction axis, W' streamed once.
    #   x_ref:    [MP, TK]      bf16  both resized+flattened images (row-padded)
    #   w_ref:    [TK, D]       bf16  mean/std folded into the weight
    #   b_ref:    [1,  D]       f32   folded normalization bias (resident)
    #   tokp_ref: [MP, T*DM]    f32   flattened token embeddings (resident)
    #   wp_ref:   [T*DM, D]     f32   mean-pool folded text projection (resident)
    #   out_ref:  [BP, 128]     f32   lane-dense: col0=sim_0 col1=sim_1
    #                                 col2=sim_direction col3=sim_image
    #   acc_ref:  [MP, D]       f32   resident accumulator across K steps
    k = pl.program_id(0)

    @pl.when(k == 0)
    def _():
        acc_ref[...] = jnp.zeros_like(acc_ref)

    acc_ref[...] += jnp.dot(x_ref[...], w_ref[...],
                            preferred_element_type=jnp.float32)

    @pl.when(k == pl.num_programs(0) - 1)
    def _():
        # tiny floor only guards the zero-padded batch rows (rsqrt(0) -> inf);
        # real rows have norms orders of magnitude above it, so this matches
        # torch's eps-free x / x.norm() exactly for the rows that are kept.
        tiny = jnp.float32(1e-30)

        # --- image features: bias + L2 normalization ---
        imf = acc_ref[...] + b_ref[...]
        imf = imf * lax.rsqrt(
            jnp.maximum(jnp.sum(imf * imf, axis=-1, keepdims=True), tiny))

        # --- text encoder: pool-folded projection + L2 normalization ---
        tfeat = jnp.dot(tokp_ref[...], wp_ref[...],
                        preferred_element_type=jnp.float32)
        tfeat = tfeat * lax.rsqrt(
            jnp.maximum(jnp.sum(tfeat * tfeat, axis=-1, keepdims=True), tiny))

        i0, i1 = imf[:BP], imf[BP:]
        t0, t1 = tfeat[:BP], tfeat[BP:]
        di, dt = i1 - i0, t1 - t0

        eps2 = jnp.float32(EPS * EPS)

        def inv_norm(v):
            # 1 / max(||v||, eps) == rsqrt(max(||v||^2, eps^2)); EUP rsqrt,
            # each norm computed exactly once.
            return lax.rsqrt(
                jnp.maximum(jnp.sum(v * v, axis=-1, keepdims=True), eps2))

        inv_i0, inv_i1 = inv_norm(i0), inv_norm(i1)
        inv_t0, inv_t1 = inv_norm(t0), inv_norm(t1)
        inv_di, inv_dt = inv_norm(di), inv_norm(dt)

        s0 = jnp.sum(i0 * t0, axis=-1, keepdims=True) * inv_i0 * inv_t0
        s1 = jnp.sum(i1 * t1, axis=-1, keepdims=True) * inv_i1 * inv_t1
        sd = jnp.sum(di * dt, axis=-1, keepdims=True) * inv_di * inv_dt
        si = jnp.sum(i0 * i1, axis=-1, keepdims=True) * inv_i0 * inv_i1

        # Single unmasked, lane-dense (BP, 128) store for all four similarities.
        lane = lax.broadcasted_iota(jnp.int32, (BP, 128), 1)
        zero = jnp.zeros((BP, 128), jnp.float32)
        out = jnp.where(lane == 0, s0, zero)
        out = out + jnp.where(lane == 1, s1, zero)
        out = out + jnp.where(lane == 2, sd, zero)
        out = out + jnp.where(lane == 3, si, zero)
        out_ref[...] = out


# ---------------------------------------------------------------------------
# One-time (hoisted) weight preparation
# ---------------------------------------------------------------------------
def build_image_encoder_params(w_img, size):
    """Fold (x - mean) / std into the image projection weight + bias."""
    n = size * size
    scale = jnp.repeat(1.0 / CLIP_STD, n)                       # [F_dim]
    mean = jnp.repeat(CLIP_MEAN, n)                             # [F_dim]
    w_folded = (scale[:, None] * w_img).astype(jnp.bfloat16)    # [F_dim, D]
    bias = (-(mean * scale) @ w_img).reshape(1, -1).astype(jnp.float32)
    return w_folded, bias


def build_text_encoder_params(w_txt, t):
    """Fold the 1/T mean-pool into the text projection.

    tok.mean(axis=1) @ W  ==  tok.reshape(B, T*DM) @ tile(W / T, (T, 1)),
    turning pool-then-project into one lane-contiguous MXU matmul.
    """
    return jnp.tile(w_txt / t, (t, 1)).astype(jnp.float32)       # [T*DM, D]


def preprocess_image(image_nchw, size):
    B, C, H, W = image_nchw.shape
    # TODO(synk): torch F.interpolate bicubic uses a=-0.75; jax 'cubic' is Keys a=-0.5.
    img = jax.image.resize(image_nchw.astype(jnp.float32),
                           (B, C, size, size), method="cubic")
    return img.reshape(B, C * size * size)


# ---------------------------------------------------------------------------
# Forward wrapper (single pallas_call)
# ---------------------------------------------------------------------------
def clip_similarity_forward(image_0, image_1, text_tokens_0, text_tokens_1,
                            w_img_folded, b_img, w_pool, *, size):
    B = image_0.shape[0]
    assert B <= BP
    f_dim, d = w_img_folded.shape

    # Both images in ONE padded bf16 batch built directly in bf16 (no big f32
    # intermediate).  Rows 0..B-1 = image_0, BP..BP+B-1 = image_1, zero pad.
    x0 = preprocess_image(image_0, size).astype(jnp.bfloat16)
    x1 = preprocess_image(image_1, size).astype(jnp.bfloat16)
    x = jnp.zeros((MP, f_dim), jnp.bfloat16)
    x = x.at[:B].set(x0).at[BP:BP + B].set(x1)

    T, DM = text_tokens_0.shape[1:]
    tok = jnp.zeros((MP, T * DM), jnp.float32)
    tok = tok.at[:B].set(text_tokens_0.reshape(B, T * DM))
    tok = tok.at[BP:BP + B].set(text_tokens_1.reshape(B, T * DM))

    tk = _pick_tk(f_dim, d)
    k_steps = f_dim // tk

    sims = pl.pallas_call(
        clip_similarity_kernel,
        out_shape=jax.ShapeDtypeStruct((BP, 128), jnp.float32),
        grid_spec=pltpu.PrefetchScalarGridSpec(
            num_scalar_prefetch=0,
            grid=(k_steps,),
            in_specs=[
                pl.BlockSpec((MP, tk), lambda k: (0, k)),       # x (streamed once)
                pl.BlockSpec((tk, d), lambda k: (k, 0)),        # W' (full output width)
                pl.BlockSpec((1, d), lambda k: (0, 0)),         # folded bias (resident)
                pl.BlockSpec((MP, T * DM), lambda k: (0, 0)),   # flattened tokens (resident)
                pl.BlockSpec((T * DM, d), lambda k: (0, 0)),    # pool-folded text proj (resident)
            ],
            out_specs=pl.BlockSpec((BP, 128), lambda k: (0, 0)),
            scratch_shapes=[pltpu.VMEM((MP, d), jnp.float32)],
        ),
        compiler_params=pltpu.CompilerParams(
            dimension_semantics=("arbitrary",)),
    )(x, w_img_folded, b_img, tok, w_pool)

    # torch F.cosine_similarity returns shape [B]
    return sims[:B, 0], sims[:B, 1], sims[:B, 2], sims[:B, 3]


# ---------------------------------------------------------------------------
if __name__ == "__main__":
    key = jax.random.PRNGKey(0)
    k_img0, k_img1, k_txt0, k_txt1, k_wimg, k_wtxt = jax.random.split(key, 6)

    B, C, H, W = 2, 3, 16, 16      # NCHW; 3 channels (CLIP mean/std are 3-vec)
    SIZE = 16                      # synthetic model input size (real ViT-L/14: 224)
    T, DM, D = 8, 128, 128         # text tokens, text width, embed dim (lane-dense)

    image_0 = jax.random.uniform(k_img0, (B, C, H, W), dtype=jnp.float32)
    image_1 = jax.random.uniform(k_img1, (B, C, H, W), dtype=jnp.float32)
    # TODO(synk): clip.tokenize(list[str]) + the CLIP text transformer have no
    # Pallas equivalent; deterministic synthetic token embeddings stand in.
    text_tokens_0 = jax.random.normal(k_txt0, (B, T, DM), dtype=jnp.float32)
    text_tokens_1 = jax.random.normal(k_txt1, (B, T, DM), dtype=jnp.float32)

    # TODO(synk): clip.load pretrained encoders replaced by deterministic
    # synthetic linear encoders with the same interface.
    F_dim = C * SIZE * SIZE
    w_img = jax.random.normal(k_wimg, (F_dim, D), jnp.float32) / F_dim ** 0.5
    w_txt = jax.random.normal(k_wtxt, (DM, D), jnp.float32) / DM ** 0.5

    # hoisted one-time folds: CLIP mean/std into the image weight, 1/T
    # mean-pool into the text projection.
    w_img_folded, b_img = build_image_encoder_params(w_img, SIZE)
    w_pool = build_text_encoder_params(w_txt, T)

    fwd = jax.jit(clip_similarity_forward, static_argnames=("size",))
    sim_0, sim_1, sim_direction, sim_image = fwd(
        image_0, image_1, text_tokens_0, text_tokens_1,
        w_img_folded, b_img, w_pool, size=SIZE)

    jax.block_until_ready((sim_0, sim_1, sim_direction, sim_image))
    assert sim_0.shape == (B,) and sim_1.shape == (B,)
    assert sim_direction.shape == (B,) and sim_image.shape == (B,)
    assert bool(jnp.all(jnp.isfinite(
        jnp.stack([sim_0, sim_1, sim_direction, sim_image]))))
    print("KERNEL_OK")
</pallas_src>

<mosaic_0001>
module attributes {stable_mosaic.version = 11 : i64} {
  func.func @clip_similarity_kernel(%arg0: i32, %arg1: memref<16x768xbf16, #tpu.memory_space<vmem>>, %arg2: memref<768x128xbf16, #tpu.memory_space<vmem>>, %arg3: memref<1x128xf32, #tpu.memory_space<vmem>>, %arg4: memref<16x1024xf32, #tpu.memory_space<vmem>>, %arg5: memref<1024x128xf32, #tpu.memory_space<vmem>>, %arg6: memref<8x128xf32, #tpu.memory_space<vmem>>, %arg7: memref<16x128xf32, #tpu.memory_space<vmem>>) attributes {dimension_semantics = [#tpu.dimension_semantics<arbitrary>], iteration_bounds = array<i64: 1>, scalar_prefetch = 0 : i64, scratch_operands = 1 : i64, tpu.core_type = #tpu.core_type<tc>, window_params = [{transform_indices = @transform_0, window_bounds = array<i64: 16, 768>}, {transform_indices = @transform_1, window_bounds = array<i64: 768, 128>}, {pipeline_mode = #tpu.pipeline_mode<synchronous>, transform_indices = @transform_2, window_bounds = array<i64: 1, 128>}, {pipeline_mode = #tpu.pipeline_mode<synchronous>, transform_indices = @transform_3, window_bounds = array<i64: 16, 1024>}, {pipeline_mode = #tpu.pipeline_mode<synchronous>, transform_indices = @transform_4, window_bounds = array<i64: 1024, 128>}, {pipeline_mode = #tpu.pipeline_mode<synchronous>, transform_indices = @transform_5, window_bounds = array<i64: 8, 128>}]} {
    %c0_i32 = arith.constant 0 : i32
    %0 = arith.cmpi eq, %arg0, %c0_i32 : i32
    %1 = arith.extui %0 : i1 to i32
    %c0_i32_0 = arith.constant 0 : i32
    %2 = arith.cmpi ne, %1, %c0_i32_0 : i32
    scf.if %2 {
      %cst_10 = arith.constant 0.000000e+00 : f32
      %12 = vector.broadcast %cst_10 : f32 to vector<16x128xf32>
      %c0_11 = arith.constant 0 : index
      %c0_12 = arith.constant 0 : index
      %13 = vector.load %arg7[%c0_11, %c0_12] : memref<16x128xf32, #tpu.memory_space<vmem>>, vector<16x128xf32>
      tpu.vector_store %arg7[%c0_11, %c0_12], %12 {strides = array<i32>} : memref<16x128xf32, #tpu.memory_space<vmem>>, vector<16x128xf32>,
    } else {
    }
    %c0 = arith.constant 0 : index
    %c0_1 = arith.constant 0 : index
    %3 = vector.load %arg7[%c0, %c0_1] : memref<16x128xf32, #tpu.memory_space<vmem>>, vector<16x128xf32>
    %c0_2 = arith.constant 0 : index
    %c0_3 = arith.constant 0 : index
    %4 = vector.load %arg1[%c0_2, %c0_3] : memref<16x768xbf16, #tpu.memory_space<vmem>>, vector<16x768xbf16>
    %c0_4 = arith.constant 0 : index
    %c0_5 = arith.constant 0 : index
    %5 = vector.load %arg2[%c0_4, %c0_5] : memref<768x128xbf16, #tpu.memory_space<vmem>>, vector<768x128xbf16>
    %cst = arith.constant dense<0.000000e+00> : vector<16x128xf32>
    %6 = tpu.matmul %4, %5, %cst {dimension_numbers = #tpu.dot_dimension_numbers<[1], [0], [0], [1], [0, 0, 1, 1], [], []>} : vector<16x768xbf16>, vector<768x128xbf16>, vector<16x128xf32> -> vector<16x128xf32>
    %7 = arith.addf %3, %6 : vector<16x128xf32>
    %c0_6 = arith.constant 0 : index
    %c0_7 = arith.constant 0 : index
    %8 = vector.load %arg7[%c0_6, %c0_7] : memref<16x128xf32, #tpu.memory_space<vmem>>, vector<16x128xf32>
    tpu.vector_store %arg7[%c0_6, %c0_7], %7 {strides = array<i32>} : memref<16x128xf32, #tpu.memory_space<vmem>>, vector<16x128xf32>,
    %c0_i32_8 = arith.constant 0 : i32
    %9 = arith.cmpi eq, %arg0, %c0_i32_8 : i32
    %10 = arith.extui %9 : i1 to i32
    %c0_i32_9 = arith.constant 0 : i32
    %11 = arith.cmpi ne, %10, %c0_i32_9 : i32
    scf.if %11 {
      %c0_10 = arith.constant 0 : index
      %c0_11 = arith.constant 0 : index
      %12 = vector.load %arg7[%c0_10, %c0_11] : memref<16x128xf32, #tpu.memory_space<vmem>>, vector<16x128xf32>
      %c0_12 = arith.constant 0 : index
      %c0_13 = arith.constant 0 : index
      %13 = vector.load %arg3[%c0_12, %c0_13] : memref<1x128xf32, #tpu.memory_space<vmem>>, vector<1x128xf32>
      %14 = vector.broadcast %13 : vector<1x128xf32> to vector<16x128xf32>
      %15 = arith.addf %12, %14 : vector<16x128xf32>
      %16 = arith.mulf %15, %15 : vector<16x128xf32>
      %cst_14 = arith.constant dense<0.000000e+00> : vector<16xf32>
      %17 = vector.multi_reduction <add>, %16, %cst_14 [1] : vector<16x128xf32> to vector<16xf32>
      %18 = vector.shape_cast %17 : vector<16xf32> to vector<16x1xf32>
      %cst_15 = arith.constant 1.000000e-30 : f32
      %19 = vector.broadcast %cst_15 : f32 to vector<16x1xf32>
      %20 = arith.maximumf %18, %19 : vector<16x1xf32>
      %21 = math.rsqrt %20 : vector<16x1xf32>
      %22 = vector.broadcast %21 : vector<16x1xf32> to vector<16x128xf32>
      %23 = arith.mulf %15, %22 : vector<16x128xf32>
      %c0_16 = arith.constant 0 : index
      %c0_17 = arith.constant 0 : index
      %24 = vector.load %arg4[%c0_16, %c0_17] : memref<16x1024xf32, #tpu.memory_space<vmem>>, vector<16x1024xf32>
      %c0_18 = arith.constant 0 : index
      %c0_19 = arith.constant 0 : index
      %25 = vector.load %arg5[%c0_18, %c0_19] : memref<1024x128xf32, #tpu.memory_space<vmem>>, vector<1024x128xf32>
      %cst_20 = arith.constant dense<0.000000e+00> : vector<16x128xf32>
      %26 = tpu.matmul %24, %25, %cst_20 {dimension_numbers = #tpu.dot_dimension_numbers<[1], [0], [0], [1], [0, 0, 1, 1], [], []>} : vector<16x1024xf32>, vector<1024x128xf32>, vector<16x128xf32> -> vector<16x128xf32>
      %27 = arith.mulf %26, %26 : vector<16x128xf32>
      %cst_21 = arith.constant dense<0.000000e+00> : vector<16xf32>
      %28 = vector.multi_reduction <add>, %27, %cst_21 [1] : vector<16x128xf32> to vector<16xf32>
      %29 = vector.shape_cast %28 : vector<16xf32> to vector<16x1xf32>
      %cst_22 = arith.constant 1.000000e-30 : f32
      %30 = vector.broadcast %cst_22 : f32 to vector<16x1xf32>
      %31 = arith.maximumf %29, %30 : vector<16x1xf32>
      %32 = math.rsqrt %31 : vector<16x1xf32>
      %33 = vector.broadcast %32 : vector<16x1xf32> to vector<16x128xf32>
      %34 = arith.mulf %26, %33 : vector<16x128xf32>
      %35 = vector.extract_strided_slice %23 {offsets = [0, 0], sizes = [8, 128], strides = [1, 1]} : vector<16x128xf32> to vector<8x128xf32>
      %36 = vector.extract_strided_slice %23 {offsets = [8, 0], sizes = [8, 128], strides = [1, 1]} : vector<16x128xf32> to vector<8x128xf32>
      %37 = vector.extract_strided_slice %34 {offsets = [0, 0], sizes = [8, 128], strides = [1, 1]} : vector<16x128xf32> to vector<8x128xf32>
      %38 = vector.extract_strided_slice %34 {offsets = [8, 0], sizes = [8, 128], strides = [1, 1]} : vector<16x128xf32> to vector<8x128xf32>
      %39 = arith.subf %36, %35 : vector<8x128xf32>
      %40 = arith.subf %38, %37 : vector<8x128xf32>
      %41 = arith.mulf %35, %35 : vector<8x128xf32>
      %cst_23 = arith.constant dense<0.000000e+00> : vector<8xf32>
      %42 = vector.multi_reduction <add>, %41, %cst_23 [1] : vector<8x128xf32> to vector<8xf32>
      %43 = vector.shape_cast %42 : vector<8xf32> to vector<8x1xf32>
      %cst_24 = arith.constant 1.000000e-16 : f32
      %44 = vector.broadcast %cst_24 : f32 to vector<8x1xf32>
      %45 = arith.maximumf %43, %44 : vector<8x1xf32>
      %46 = math.rsqrt %45 : vector<8x1xf32>
      %47 = arith.mulf %36, %36 : vector<8x128xf32>
      %cst_25 = arith.constant dense<0.000000e+00> : vector<8xf32>
      %48 = vector.multi_reduction <add>, %47, %cst_25 [1] : vector<8x128xf32> to vector<8xf32>
      %49 = vector.shape_cast %48 : vector<8xf32> to vector<8x1xf32>
      %cst_26 = arith.constant 1.000000e-16 : f32
      %50 = vector.broadcast %cst_26 : f32 to vector<8x1xf32>
      %51 = arith.maximumf %49, %50 : vector<8x1xf32>
      %52 = math.rsqrt %51 : vector<8x1xf32>
      %53 = arith.mulf %37, %37 : vector<8x128xf32>
      %cst_27 = arith.constant dense<0.000000e+00> : vector<8xf32>
      %54 = vector.multi_reduction <add>, %53, %cst_27 [1] : vector<8x128xf32> to vector<8xf32>
      %55 = vector.shape_cast %54 : vector<8xf32> to vector<8x1xf32>
      %cst_28 = arith.constant 1.000000e-16 : f32
      %56 = vector.broadcast %cst_28 : f32 to vector<8x1xf32>
      %57 = arith.maximumf %55, %56 : vector<8x1xf32>
      %58 = math.rsqrt %57 : vector<8x1xf32>
      %59 = arith.mulf %38, %38 : vector<8x128xf32>
      %cst_29 = arith.constant dense<0.000000e+00> : vector<8xf32>
      %60 = vector.multi_reduction <add>, %59, %cst_29 [1] : vector<8x128xf32> to vector<8xf32>
      %61 = vector.shape_cast %60 : vector<8xf32> to vector<8x1xf32>
      %cst_30 = arith.constant 1.000000e-16 : f32
      %62 = vector.broadcast %cst_30 : f32 to vector<8x1xf32>
      %63 = arith.maximumf %61, %62 : vector<8x1xf32>
      %64 = math.rsqrt %63 : vector<8x1xf32>
      %65 = arith.mulf %39, %39 : vector<8x128xf32>
      %cst_31 = arith.constant dense<0.000000e+00> : vector<8xf32>
      %66 = vector.multi_reduction <add>, %65, %cst_31 [1] : vector<8x128xf32> to vector<8xf32>
      %67 = vector.shape_cast %66 : vector<8xf32> to vector<8x1xf32>
      %cst_32 = arith.constant 1.000000e-16 : f32
      %68 = vector.broadcast %cst_32 : f32 to vector<8x1xf32>
      %69 = arith.maximumf %67, %68 : vector<8x1xf32>
      %70 = math.rsqrt %69 : vector<8x1xf32>
      %71 = arith.mulf %40, %40 : vector<8x128xf32>
      %cst_33 = arith.constant dense<0.000000e+00> : vector<8xf32>
      %72 = vector.multi_reduction <add>, %71, %cst_33 [1] : vector<8x128xf32> to vector<8xf32>
      %73 = vector.shape_cast %72 : vector<8xf32> to vector<8x1xf32>
      %cst_34 = arith.constant 1.000000e-16 : f32
      %74 = vector.broadcast %cst_34 : f32 to vector<8x1xf32>
      %75 = arith.maximumf %73, %74 : vector<8x1xf32>
      %76 = math.rsqrt %75 : vector<8x1xf32>
      %77 = arith.mulf %35, %37 : vector<8x128xf32>
      %cst_35 = arith.constant dense<0.000000e+00> : vector<8xf32>
      %78 = vector.multi_reduction <add>, %77, %cst_35 [1] : vector<8x128xf32> to vector<8xf32>
      %79 = vector.shape_cast %78 : vector<8xf32> to vector<8x1xf32>
      %80 = arith.mulf %79, %46 : vector<8x1xf32>
      %81 = arith.mulf %80, %58 : vector<8x1xf32>
      %82 = arith.mulf %36, %38 : vector<8x128xf32>
      %cst_36 = arith.constant dense<0.000000e+00> : vector<8xf32>
      %83 = vector.multi_reduction <add>, %82, %cst_36 [1] : vector<8x128xf32> to vector<8xf32>
      %84 = vector.shape_cast %83 : vector<8xf32> to vector<8x1xf32>
      %85 = arith.mulf %84, %52 : vector<8x1xf32>
      %86 = arith.mulf %85, %64 : vector<8x1xf32>
      %87 = arith.mulf %39, %40 : vector<8x128xf32>
      %cst_37 = arith.constant dense<0.000000e+00> : vector<8xf32>
      %88 = vector.multi_reduction <add>, %87, %cst_37 [1] : vector<8x128xf32> to vector<8xf32>
      %89 = vector.shape_cast %88 : vector<8xf32> to vector<8x1xf32>
      %90 = arith.mulf %89, %70 : vector<8x1xf32>
      %91 = arith.mulf %90, %76 : vector<8x1xf32>
      %92 = arith.mulf %35, %36 : vector<8x128xf32>
      %cst_38 = arith.constant dense<0.000000e+00> : vector<8xf32>
      %93 = vector.multi_reduction <add>, %92, %cst_38 [1] : vector<8x128xf32> to vector<8xf32>
      %94 = vector.shape_cast %93 : vector<8xf32> to vector<8x1xf32>
      %95 = arith.mulf %94, %46 : vector<8x1xf32>
      %96 = arith.mulf %95, %52 : vector<8x1xf32>
      %97 = tpu.iota {dimensions = array<i32: 1>} : vector<8x128xi32>
      %cst_39 = arith.constant 0.000000e+00 : f32
      %98 = vector.broadcast %cst_39 : f32 to vector<8x128xf32>
      %c0_i32_40 = arith.constant 0 : i32
      %99 = vector.broadcast %c0_i32_40 : i32 to vector<8x128xi32>
      %100 = arith.cmpi eq, %97, %99 : vector<8x128xi32>
      %101 = vector.shape_cast %81 : vector<8x1xf32> to vector<8x1xf32>
      %102 = vector.broadcast %101 : vector<8x1xf32> to vector<8x128xf32>
      %103 = arith.select %100, %102, %98 : vector<8x128xi1>, vector<8x128xf32>
      %c1_i32 = arith.constant 1 : i32
      %104 = vector.broadcast %c1_i32 : i32 to vector<8x128xi32>
      %105 = arith.cmpi eq, %97, %104 : vector<8x128xi32>
      %106 = vector.shape_cast %86 : vector<8x1xf32> to vector<8x1xf32>
      %107 = vector.broadcast %106 : vector<8x1xf32> to vector<8x128xf32>
      %108 = arith.select %105, %107, %98 : vector<8x128xi1>, vector<8x128xf32>
      %109 = arith.addf %103, %108 : vector<8x128xf32>
      %c2_i32 = arith.constant 2 : i32
      %110 = vector.broadcast %c2_i32 : i32 to vector<8x128xi32>
      %111 = arith.cmpi eq, %97, %110 : vector<8x128xi32>
      %112 = vector.shape_cast %91 : vector<8x1xf32> to vector<8x1xf32>
      %113 = vector.broadcast %112 : vector<8x1xf32> to vector<8x128xf32>
      %114 = arith.select %111, %113, %98 : vector<8x128xi1>, vector<8x128xf32>
      %115 = arith.addf %109, %114 : vector<8x128xf32>
      %c3_i32 = arith.constant 3 : i32
      %116 = vector.broadcast %c3_i32 : i32 to vector<8x128xi32>
      %117 = arith.cmpi eq, %97, %116 : vector<8x128xi32>
      %118 = vector.shape_cast %96 : vector<8x1xf32> to vector<8x1xf32>
      %119 = vector.broadcast %118 : vector<8x1xf32> to vector<8x128xf32>
      %120 = arith.select %117, %119, %98 : vector<8x128xi1>, vector<8x128xf32>
      %121 = arith.addf %115, %120 : vector<8x128xf32>
      %c0_41 = arith.constant 0 : index
      %c0_42 = arith.constant 0 : index
      %122 = vector.load %arg6[%c0_41, %c0_42] : memref<8x128xf32, #tpu.memory_space<vmem>>, vector<8x128xf32>
      tpu.vector_store %arg6[%c0_41, %c0_42], %121 {strides = array<i32>} : memref<8x128xf32, #tpu.memory_space<vmem>>, vector<8x128xf32>,
    } else {
    }
    return
  }
  func.func @transform_0(%arg0: i32) -> (i32, i32) {
    %c0_i32 = arith.constant 0 : i32
    %c0_i32_0 = arith.constant 0 : i32
    return %c0_i32, %arg0 : i32, i32
  }
  func.func @transform_1(%arg0: i32) -> (i32, i32) {
    %c0_i32 = arith.constant 0 : i32
    %c0_i32_0 = arith.constant 0 : i32
    return %arg0, %c0_i32 : i32, i32
  }
  func.func @transform_2(%arg0: i32) -> (i32, i32) {
    %c0_i32 = arith.constant 0 : i32
    %c0_i32_0 = arith.constant 0 : i32
    %c0_i32_1 = arith.constant 0 : i32
    return %c0_i32, %c0_i32_0 : i32, i32
  }
  func.func @transform_3(%arg0: i32) -> (i32, i32) {
    %c0_i32 = arith.constant 0 : i32
    %c0_i32_0 = arith.constant 0 : i32
    %c0_i32_1 = arith.constant 0 : i32
    return %c0_i32, %c0_i32_0 : i32, i32
  }
  func.func @transform_4(%arg0: i32) -> (i32, i32) {
    %c0_i32 = arith.constant 0 : i32
    %c0_i32_0 = arith.constant 0 : i32
    %c0_i32_1 = arith.constant 0 : i32
    return %c0_i32, %c0_i32_0 : i32, i32
  }
  func.func @transform_5(%arg0: i32) -> (i32, i32) {
    %c0_i32 = arith.constant 0 : i32
    %c0_i32_0 = arith.constant 0 : i32
    %c0_i32_1 = arith.constant 0 : i32
    return %c0_i32, %c0_i32_0 : i32, i32
  }
}

</mosaic_0001>

<llo_original>
// kernel: clip_similarity_forward.1
$region0: #{clip_similarity_forward.1}
  #allocation0 [shape = 'u32[]', space=smem, size = 0x4, offset = 0x4, fixed_abs, tag = 'smem constant byte address 0x4 - core index']
  #allocation1 [shape = 'u32[144,128]{1,0:T(1,128)}', space=vmem, size = 0x12000, scoped, tag = 'internal scratch']
  #allocation2 [shape = 'f32[16,128]{1,0:T(8,128)}', space=vmem, size = 0x2000, scoped, tag = 'scratch operand']
  %s0 = inlined_call_operand.vmem [shape: bf16[16,768], index: 0, kind: input, shape index: {}]
  %s1 = inlined_call_operand.vmem [shape: bf16[768,128], index: 1, kind: input, shape index: {}]
  %s2 = inlined_call_operand.vmem [shape: f32[1,128], index: 2, kind: input, shape index: {}]
  %s3 = inlined_call_operand.vmem [shape: f32[16,1024], index: 3, kind: input, shape index: {}]
  %s4 = inlined_call_operand.hbm [shape: f32[1024,128], index: 4, kind: input, shape index: {}]
  %s5 = inlined_call_operand.vmem [shape: f32[8,128], index: 5, kind: output, shape index: {}]
  %s6 = sld [smem:[#allocation0]]
  $region42: #{clip_similarity_forward.1} parent=0
    _
  %s8 = ssub.s32 1, %s6
  %s9 = scalar_select 0, %s8, %s6
  $region1: #{clip_similarity_forward.1} parent=0
    #allocation3 [shape = 'u8[524288]{0}', space=vmem, size = 0x80000, scoped, tag = 'input window, operand 4, single buffered']
    #allocation4 [shape = 's32[1]{0}', space=sflag, size = 0x4, scoped, tag = 'scoped memory for clip_similarity_forward.1']
    %10 = vsyncpa [#allocation4], 0
    // Predicated region
    $region2: #{clip_similarity_forward.1} parent=1 // pred_check
      _
    $region3: #{clip_similarity_forward.1} parent=1 // pred_check_branch
      %12 = sbr.rel (0) target = $region5
    $region4: #{clip_similarity_forward.1} parent=1 // pred_region
      _
    $region5: #{clip_similarity_forward.1} parent=1 // pred_fallthru
      _
    // Predicated region
    $region6: #{clip_similarity_forward.1} parent=1 // pred_check
      _
    $region7: #{clip_similarity_forward.1} parent=1 // pred_check_branch
      %14 = sbr.rel (0) target = $region9
    $region8: #{clip_similarity_forward.1} parent=1 // pred_region
      _
    $region9: #{clip_similarity_forward.1} parent=1 // pred_fallthru
      _
    // Predicated region
    $region10: #{clip_similarity_forward.1} parent=1 // pred_check
      _
    $region11: #{clip_similarity_forward.1} parent=1 // pred_check_branch
      %16 = sbr.rel (0) target = $region13
    $region12: #{clip_similarity_forward.1} parent=1 // pred_region
      _
    $region13: #{clip_similarity_forward.1} parent=1 // pred_fallthru
      _
    // Predicated region
    $region14: #{clip_similarity_forward.1} parent=1 // pred_check
      _
    $region15: #{clip_similarity_forward.1} parent=1 // pred_check_branch
      %18 = sbr.rel (0) target = $region17
    $region16: #{clip_similarity_forward.1} parent=1 // pred_region
      _
    $region17: #{clip_similarity_forward.1} parent=1 // pred_fallthru
      _
    // Predicated region
    $region18: #{clip_similarity_forward.1} parent=1 // pred_check
      _
    $region19: #{clip_similarity_forward.1} parent=1 // pred_check_branch
      %20 = sbr.rel (0) target = $region21
    $region20: #{clip_similarity_forward.1} parent=1 // pred_region
      %s22 = ssub.s32 16384, 16384
      %23 = vsyncadd [#allocation4], %s22
      %s24 = sshll.u32 [#allocation3], 4
      %s25 = int_to_ptr.vmem [resolvable:$true] %s24
      %30 = dma.hbm_to_vmem [thread:$0]  %s4, 16384, %s25, [#allocation4], 128, 128, 8
    $region21: #{clip_similarity_forward.1} parent=1 // pred_fallthru
      _
    // Predicated region
    $region22: #{clip_similarity_forward.1} parent=1 // pred_check
      _
    $region23: #{clip_similarity_forward.1} parent=1 // pred_check_branch
      %32 = sbr.rel (0) target = $region25
    $region24: #{clip_similarity_forward.1} parent=1 // pred_region
      %33 = dma.done [#allocation4], 16384
    $region25: #{clip_similarity_forward.1} parent=1 // pred_fallthru
      _
    %p35 = scmp.eq.s32.totalorder 0, 0
    // Predicated region
    $region26: #{clip_similarity_forward.1} parent=1 // pred_check
      %p36 = pneg %p35
    $region27: #{clip_similarity_forward.1} parent=1 // pred_check_branch
      %38 = sbr.rel (%p36) target = $region29
    $region28: #{clip_similarity_forward.1} parent=1 // pred_region
      %39 = vst [vmem:[#allocation2] sm:$0xff] 0.0
      %40 = vst [vmem:[#allocation2 + $0x8] sm:$0xff] 0.0
    $region29: #{clip_similarity_forward.1} parent=1 // pred_fallthru
      _
    %v41 = vld [vmem:[#allocation2] sm:$0xff]
    %v42 = vld [vmem:[#allocation2 + $0x8] sm:$0xff]
    %v43 = vld [vmem:[%s0] sm:$0xff]
    %v44 = vld [vmem:[%s0 + $0x8] sm:$0xff]
    %v45 = vld [vmem:[%s0 + $0x10] sm:$0xff]
    %v46 = vld [vmem:[%s0 + $0x18] sm:$0xff]
    %v47 = vld [vmem:[%s0 + $0x20] sm:$0xff]
    %v48 = vld [vmem:[%s0 + $0x28] sm:$0xff]
    %v49 = vld [vmem:[%s1] sm:$0xf]
    %v50 = vld [vmem:[%s1 + $0x4] sm:$0xf]
    %v51 = vld [vmem:[%s1 + $0x8] sm:$0xf]
    %v52 = vld [vmem:[%s1 + $0xc] sm:$0xf]
    %v53 = vld [vmem:[%s1 + $0x10] sm:$0xf]
    %v54 = vld [vmem:[%s1 + $0x14] sm:$0xf]
    %v55 = vld [vmem:[%s1 + $0x18] sm:$0xf]
    %v56 = vld [vmem:[%s1 + $0x1c] sm:$0xf]
    %v57 = vld [vmem:[%s1 + $0x20] sm:$0xf]
    %v58 = vld [vmem:[%s1 + $0x24] sm:$0xf]
    %v59 = vld [vmem:[%s1 + $0x28] sm:$0xf]
    %v60 = vld [vmem:[%s1 + $0x2c] sm:$0xf]
    %v61 = vld [vmem:[%s1 + $0x30] sm:$0xf]
    %v62 = vld [vmem:[%s1 + $0x34] sm:$0xf]
    %v63 = vld [vmem:[%s1 + $0x38] sm:$0xf]
    %v64 = vld [vmem:[%s1 + $0x3c] sm:$0xf]
    %v65 = vld [vmem:[%s1 + $0x40] sm:$0xf]
    %v66 = vld [vmem:[%s1 + $0x44] sm:$0xf]
    %v67 = vld [vmem:[%s1 + $0x48] sm:$0xf]
    %v68 = vld [vmem:[%s1 + $0x4c] sm:$0xf]
    %v69 = vld [vmem:[%s1 + $0x50] sm:$0xf]
    %v70 = vld [vmem:[%s1 + $0x54] sm:$0xf]
    %v71 = vld [vmem:[%s1 + $0x58] sm:$0xf]
    %v72 = vld [vmem:[%s1 + $0x5c] sm:$0xf]
    %v73 = vld [vmem:[%s1 + $0x60] sm:$0xf]
    %v74 = vld [vmem:[%s1 + $0x64] sm:$0xf]
    %v75 = vld [vmem:[%s1 + $0x68] sm:$0xf]
    %v76 = vld [vmem:[%s1 + $0x6c] sm:$0xf]
    %v77 = vld [vmem:[%s1 + $0x70] sm:$0xf]
    %v78 = vld [vmem:[%s1 + $0x74] sm:$0xf]
    %v79 = vld [vmem:[%s1 + $0x78] sm:$0xf]
    %v80 = vld [vmem:[%s1 + $0x7c] sm:$0xf]
    %v81 = vld [vmem:[%s1 + $0x80] sm:$0xf]
    %v82 = vld [vmem:[%s1 + $0x84] sm:$0xf]
    %v83 = vld [vmem:[%s1 + $0x88] sm:$0xf]
    %v84 = vld [vmem:[%s1 + $0x8c] sm:$0xf]
    %v85 = vld [vmem:[%s1 + $0x90] sm:$0xf]
    %v86 = vld [vmem:[%s1 + $0x94] sm:$0xf]
    %v87 = vld [vmem:[%s1 + $0x98] sm:$0xf]
    %v88 = vld [vmem:[%s1 + $0x9c] sm:$0xf]
    %v89 = vld [vmem:[%s1 + $0xa0] sm:$0xf]
    %v90 = vld [vmem:[%s1 + $0xa4] sm:$0xf]
    %v91 = vld [vmem:[%s1 + $0xa8] sm:$0xf]
    %v92 = vld [vmem:[%s1 + $0xac] sm:$0xf]
    %v93 = vld [vmem:[%s1 + $0xb0] sm:$0xf]
    %v94 = vld [vmem:[%s1 + $0xb4] sm:$0xf]
    %v95 = vld [vmem:[%s1 + $0xb8] sm:$0xf]
    %v96 = vld [vmem:[%s1 + $0xbc] sm:$0xf]
    %v97 = vld [vmem:[%s1 + $0xc0] sm:$0xf]
    %v98 = vld [vmem:[%s1 + $0xc4] sm:$0xf]
    %v99 = vld [vmem:[%s1 + $0xc8] sm:$0xf]
    %v100 = vld [vmem:[%s1 + $0xcc] sm:$0xf]
    %v101 = vld [vmem:[%s1 + $0xd0] sm:$0xf]
    %v102 = vld [vmem:[%s1 + $0xd4] sm:$0xf]
    %v103 = vld [vmem:[%s1 + $0xd8] sm:$0xf]
    %v104 = vld [vmem:[%s1 + $0xdc] sm:$0xf]
    %v105 = vld [vmem:[%s1 + $0xe0] sm:$0xf]
    %v106 = vld [vmem:[%s1 + $0xe4] sm:$0xf]
    %v107 = vld [vmem:[%s1 + $0xe8] sm:$0xf]
    %v108 = vld [vmem:[%s1 + $0xec] sm:$0xf]
    %v109 = vld [vmem:[%s1 + $0xf0] sm:$0xf]
    %v110 = vld [vmem:[%s1 + $0xf4] sm:$0xf]
    %v111 = vld [vmem:[%s1 + $0xf8] sm:$0xf]
    %v112 = vld [vmem:[%s1 + $0xfc] sm:$0xf]
    %v113 = vld [vmem:[%s1 + $0x100] sm:$0xf]
    %v114 = vld [vmem:[%s1 + $0x104] sm:$0xf]
    %v115 = vld [vmem:[%s1 + $0x108] sm:$0xf]
    %v116 = vld [vmem:[%s1 + $0x10c] sm:$0xf]
    %v117 = vld [vmem:[%s1 + $0x110] sm:$0xf]
    %v118 = vld [vmem:[%s1 + $0x114] sm:$0xf]
    %v119 = vld [vmem:[%s1 + $0x118] sm:$0xf]
    %v120 = vld [vmem:[%s1 + $0x11c] sm:$0xf]
    %v121 = vld [vmem:[%s1 + $0x120] sm:$0xf]
    %v122 = vld [vmem:[%s1 + $0x124] sm:$0xf]
    %v123 = vld [vmem:[%s1 + $0x128] sm:$0xf]
    %v124 = vld [vmem:[%s1 + $0x12c] sm:$0xf]
    %v125 = vld [vmem:[%s1 + $0x130] sm:$0xf]
    %v126 = vld [vmem:[%s1 + $0x134] sm:$0xf]
    %v127 = vld [vmem:[%s1 + $0x138] sm:$0xf]
    %v128 = vld [vmem:[%s1 + $0x13c] sm:$0xf]
    %v129 = vld [vmem:[%s1 + $0x140] sm:$0xf]
    %v130 = vld [vmem:[%s1 + $0x144] sm:$0xf]
    %v131 = vld [vmem:[%s1 + $0x148] sm:$0xf]
    %v132 = vld [vmem:[%s1 + $0x14c] sm:$0xf]
    %v133 = vld [vmem:[%s1 + $0x150] sm:$0xf]
    %v134 = vld [vmem:[%s1 + $0x154] sm:$0xf]
    %v135 = vld [vmem:[%s1 + $0x158] sm:$0xf]
    %v136 = vld [vmem:[%s1 + $0x15c] sm:$0xf]
    %v137 = vld [vmem:[%s1 + $0x160] sm:$0xf]
    %v138 = vld [vmem:[%s1 + $0x164] sm:$0xf]
    %v139 = vld [vmem:[%s1 + $0x168] sm:$0xf]
    %v140 = vld [vmem:[%s1 + $0x16c] sm:$0xf]
    %v141 = vld [vmem:[%s1 + $0x170] sm:$0xf]
    %v142 = vld [vmem:[%s1 + $0x174] sm:$0xf]
    %v143 = vld [vmem:[%s1 + $0x178] sm:$0xf]
    %v144 = vld [vmem:[%s1 + $0x17c] sm:$0xf]
    %v151 = vunpack.c.l.b16 %v43
    %v152 = vunpack.c.h.b16 %v43
    %v153 = vunpack.c.l.b16 %v44
    %v154 = vunpack.c.h.b16 %v44
    %v155 = vunpack.c.l.b16 %v45
    %v156 = vunpack.c.h.b16 %v45
    %v157 = vunpack.c.l.b16 %v46
    %v158 = vunpack.c.h.b16 %v46
    %v159 = vunpack.c.l.b16 %v47
    %v160 = vunpack.c.h.b16 %v47
    %v161 = vunpack.c.l.b16 %v48
    %v162 = vunpack.c.h.b16 %v48
    %v163 = vpack.c.b16 %v157, %v151
    %v164 = vpack.c.b16 %v158, %v152
    %v165 = vpack.c.b16 %v159, %v153
    %v166 = vpack.c.b16 %v160, %v154
    %v167 = vpack.c.b16 %v161, %v155
    %v168 = vpack.c.b16 %v162, %v156
    %v271 = vunpack.c.l.b16 %v49
    %v272 = vunpack.c.l.b16 %v50
    %v273 = vunpack.c.l.b16 %v51
    %v274 = vunpack.c.l.b16 %v52
    %v275 = vunpack.c.l.b16 %v53
    %v276 = vunpack.c.l.b16 %v54
    %v277 = vunpack.c.l.b16 %v55
    %v278 = vunpack.c.l.b16 %v56
    %v279 = vunpack.c.l.b16 %v57
    %v280 = vunpack.c.l.b16 %v58
    %v281 = vunpack.c.l.b16 %v59
    %v282 = vunpack.c.l.b16 %v60
    %v283 = vunpack.c.l.b16 %v61
    %v284 = vunpack.c.l.b16 %v62
    %v285 = vunpack.c.l.b16 %v63
    %v286 = vunpack.c.l.b16 %v64
    %v287 = vunpack.c.l.b16 %v65
    %v288 = vunpack.c.l.b16 %v66
    %v289 = vunpack.c.l.b16 %v67
    %v290 = vunpack.c.l.b16 %v68
    %v291 = vunpack.c.l.b16 %v69
    %v292 = vunpack.c.l.b16 %v70
    %v293 = vunpack.c.l.b16 %v71
    %v294 = vunpack.c.l.b16 %v72
    %v295 = vunpack.c.l.b16 %v73
    %v296 = vunpack.c.l.b16 %v74
    %v297 = vunpack.c.l.b16 %v75
    %v298 = vunpack.c.l.b16 %v76
    %v299 = vunpack.c.l.b16 %v77
    %v300 = vunpack.c.l.b16 %v78
    %v301 = vunpack.c.l.b16 %v79
    %v302 = vunpack.c.l.b16 %v80
    %v303 = vunpack.c.l.b16 %v81
    %v304 = vunpack.c.l.b16 %v82
    %v305 = vunpack.c.l.b16 %v83
    %v306 = vunpack.c.l.b16 %v84
    %v307 = vunpack.c.l.b16 %v85
    %v308 = vunpack.c.l.b16 %v86
    %v309 = vunpack.c.l.b16 %v87
    %v310 = vunpack.c.l.b16 %v88
    %v311 = vunpack.c.l.b16 %v89
    %v312 = vunpack.c.l.b16 %v90
    %v313 = vunpack.c.l.b16 %v91
    %v314 = vunpack.c.l.b16 %v92
    %v315 = vunpack.c.l.b16 %v93
    %v316 = vunpack.c.l.b16 %v94
    %v317 = vunpack.c.l.b16 %v95
    %v318 = vunpack.c.l.b16 %v96
    %v319 = vunpack.c.l.b16 %v97
    %v320 = vunpack.c.l.b16 %v98
    %v321 = vunpack.c.l.b16 %v99
    %v322 = vunpack.c.l.b16 %v100
    %v323 = vunpack.c.l.b16 %v101
    %v324 = vunpack.c.l.b16 %v102
    %v325 = vunpack.c.l.b16 %v103
    %v326 = vunpack.c.l.b16 %v104
    %v327 = vunpack.c.l.b16 %v105
    %v328 = vunpack.c.l.b16 %v106
    %v329 = vunpack.c.l.b16 %v107
    %v330 = vunpack.c.l.b16 %v108
    %v331 = vunpack.c.l.b16 %v109
    %v332 = vunpack.c.l.b16 %v110
    %v333 = vunpack.c.l.b16 %v111
    %v334 = vunpack.c.l.b16 %v112
    %v335 = vunpack.c.l.b16 %v113
    %v336 = vunpack.c.l.b16 %v114
    %v337 = vunpack.c.l.b16 %v115
    %v338 = vunpack.c.l.b16 %v116
    %v339 = vunpack.c.l.b16 %v117
    %v340 = vunpack.c.l.b16 %v118
    %v341 = vunpack.c.l.b16 %v119
    %v342 = vunpack.c.l.b16 %v120
    %v343 = vunpack.c.l.b16 %v121
    %v344 = vunpack.c.l.b16 %v122
    %v345 = vunpack.c.l.b16 %v123
    %v346 = vunpack.c.l.b16 %v124
    %v347 = vunpack.c.l.b16 %v125
    %v348 = vunpack.c.l.b16 %v126
    %v349 = vunpack.c.l.b16 %v127
    %v350 = vunpack.c.l.b16 %v128
    %v351 = vunpack.c.l.b16 %v129
    %v352 = vunpack.c.l.b16 %v130
    %v353 = vunpack.c.l.b16 %v131
    %v354 = vunpack.c.l.b16 %v132
    %v355 = vunpack.c.l.b16 %v133
    %v356 = vunpack.c.l.b16 %v134
    %v357 = vunpack.c.l.b16 %v135
    %v358 = vunpack.c.l.b16 %v136
    %v359 = vunpack.c.l.b16 %v137
    %v360 = vunpack.c.l.b16 %v138
    %v361 = vunpack.c.l.b16 %v139
    %v362 = vunpack.c.l.b16 %v140
    %v363 = vunpack.c.l.b16 %v141
    %v364 = vunpack.c.l.b16 %v142
    %v365 = vunpack.c.l.b16 %v143
    %v366 = vunpack.c.l.b16 %v144
    %v367 = vpack.c.b16 %v272, %v271
    %v368 = vpack.c.b16 %v274, %v273
    %v369 = vpack.c.b16 %v276, %v275
    %v370 = vpack.c.b16 %v278, %v277
    %v371 = vpack.c.b16 %v280, %v279
    %v372 = vpack.c.b16 %v282, %v281
    %v373 = vpack.c.b16 %v284, %v283
    %v374 = vpack.c.b16 %v286, %v285
    %v375 = vpack.c.b16 %v288, %v287
    %v376 = vpack.c.b16 %v290, %v289
    %v377 = vpack.c.b16 %v292, %v291
    %v378 = vpack.c.b16 %v294, %v293
    %v379 = vpack.c.b16 %v296, %v295
    %v380 = vpack.c.b16 %v298, %v297
    %v381 = vpack.c.b16 %v300, %v299
    %v382 = vpack.c.b16 %v302, %v301
    %v383 = vpack.c.b16 %v304, %v303
    %v384 = vpack.c.b16 %v306, %v305
    %v385 = vpack.c.b16 %v308, %v307
    %v386 = vpack.c.b16 %v310, %v309
    %v387 = vpack.c.b16 %v312, %v311
    %v388 = vpack.c.b16 %v314, %v313
    %v389 = vpack.c.b16 %v316, %v315
    %v390 = vpack.c.b16 %v318, %v317
    %v391 = vpack.c.b16 %v320, %v319
    %v392 = vpack.c.b16 %v322, %v321
    %v393 = vpack.c.b16 %v324, %v323
    %v394 = vpack.c.b16 %v326, %v325
    %v395 = vpack.c.b16 %v328, %v327
    %v396 = vpack.c.b16 %v330, %v329
    %v397 = vpack.c.b16 %v332, %v331
    %v398 = vpack.c.b16 %v334, %v333
    %v399 = vpack.c.b16 %v336, %v335
    %v400 = vpack.c.b16 %v338, %v337
    %v401 = vpack.c.b16 %v340, %v339
    %v402 = vpack.c.b16 %v342, %v341
    %v403 = vpack.c.b16 %v344, %v343
    %v404 = vpack.c.b16 %v346, %v345
    %v405 = vpack.c.b16 %v348, %v347
    %v406 = vpack.c.b16 %v350, %v349
    %v407 = vpack.c.b16 %v352, %v351
    %v408 = vpack.c.b16 %v354, %v353
    %v409 = vpack.c.b16 %v356, %v355
    %v410 = vpack.c.b16 %v358, %v357
    %v411 = vpack.c.b16 %v360, %v359
    %v412 = vpack.c.b16 %v362, %v361
    %v413 = vpack.c.b16 %v364, %v363
    %v414 = vpack.c.b16 %v366, %v365
    %463 = vmatprep.subr.bf16.mxu0 0
    %464 = vmatpush1.bf16.msra.mxu0 %v374
    %465 = vmatprep.subr.bf16.mxu0 0
    %466 = vmatpush1.bf16.msra.mxu0 %v373
    %467 = vmatprep.subr.bf16.mxu0 0
    %468 = vmatpush1.bf16.msra.mxu0 %v372
    %469 = vmatprep.subr.bf16.mxu0 0
    %470 = vmatpush1.bf16.msra.mxu0 %v371
    %471 = vmatprep.subr.bf16.mxu0 0
    %472 = vmatpush1.bf16.msra.mxu0 %v370
    %473 = vmatprep.subr.bf16.mxu0 0
    %474 = vmatpush1.bf16.msra.mxu0 %v369
    %475 = vmatprep.subr.bf16.mxu0 0
    %476 = vmatpush1.bf16.msra.mxu0 %v368
    %477 = vmatprep.subr.bf16.mxu0 0
    %478 = vmatpush1.bf16.msra.mxu0 %v367
    %479 = vmatprep.subr.bf16.mxu0 0
    %480 = vmatpush2.bf16.msra.mxu0 %v382
    %481 = vmatprep.subr.bf16.mxu0 0
    %482 = vmatpush2.bf16.msra.mxu0 %v381
    %483 = vmatprep.subr.bf16.mxu0 0
    %484 = vmatpush2.bf16.msra.mxu0 %v380
    %485 = vmatprep.subr.bf16.mxu0 0
    %486 = vmatpush2.bf16.msra.mxu0 %v379
    %487 = vmatprep.subr.bf16.mxu0 0
    %488 = vmatpush2.bf16.msra.mxu0 %v378
    %489 = vmatprep.subr.bf16.mxu0 0
    %490 = vmatpush2.bf16.msra.mxu0 %v377
    %491 = vmatprep.subr.bf16.mxu0 0
    %492 = vmatpush2.bf16.msra.mxu0 %v376
    %493 = vmatprep.subr.bf16.mxu0 0
    %494 = vmatpush2.bf16.msra.mxu0 %v375
    %495 = vmatprep.mubr.bf16.mxu0 %v164
    %496 = vmatmul.mubr.bf16.gmra.mxu0 %v163
    %v497 = vpop.f32.mrf.mxu0
    %v498 = vadd.f32 0.0, %v497
    %v499 = vpop.f32.mrf.mxu0
    %v500 = vpop.f32.mrf.mxu0
    %v501 = vadd.f32 0.0, %v500
    %v502 = vpop.f32.mrf.mxu0
    %503 = vdwg.mxu0
    %504 = vmatprep.subr.bf16.mxu0 0
    %505 = vmatpush1.bf16.msra.mxu0 %v390
    %506 = vmatprep.subr.bf16.mxu0 0
    %507 = vmatpush1.bf16.msra.mxu0 %v389
    %508 = vmatprep.subr.bf16.mxu0 0
    %509 = vmatpush1.bf16.msra.mxu0 %v388
    %510 = vmatprep.subr.bf16.mxu0 0
    %511 = vmatpush1.bf16.msra.mxu0 %v387
    %512 = vmatprep.subr.bf16.mxu0 0
    %513 = vmatpush1.bf16.msra.mxu0 %v386
    %514 = vmatprep.subr.bf16.mxu0 0
    %515 = vmatpush1.bf16.msra.mxu0 %v385
    %516 = vmatprep.subr.bf16.mxu0 0
    %517 = vmatpush1.bf16.msra.mxu0 %v384
    %518 = vmatprep.subr.bf16.mxu0 0
    %519 = vmatpush1.bf16.msra.mxu0 %v383
    %520 = vmatprep.subr.bf16.mxu0 0
    %521 = vmatpush2.bf16.msra.mxu0 %v398
    %522 = vmatprep.subr.bf16.mxu0 0
    %523 = vmatpush2.bf16.msra.mxu0 %v397
    %524 = vmatprep.subr.bf16.mxu0 0
    %525 = vmatpush2.bf16.msra.mxu0 %v396
    %526 = vmatprep.subr.bf16.mxu0 0
    %527 = vmatpush2.bf16.msra.mxu0 %v395
    %528 = vmatprep.subr.bf16.mxu0 0
    %529 = vmatpush2.bf16.msra.mxu0 %v394
    %530 = vmatprep.subr.bf16.mxu0 0
    %531 = vmatpush2.bf16.msra.mxu0 %v393
    %532 = vmatprep.subr.bf16.mxu0 0
    %533 = vmatpush2.bf16.msra.mxu0 %v392
    %534 = vmatprep.subr.bf16.mxu0 0
    %535 = vmatpush2.bf16.msra.mxu0 %v391
    %536 = vmatprep.mubr.bf16.mxu0 %v166
    %537 = vmatmul.mubr.bf16.gmra.mxu0 %v165
    %v538 = vpop.f32.mrf.mxu0
    %v539 = vadd.f32 %v498, %v538
    %v540 = vpop.f32.mrf.mxu0
    %v541 = vpop.f32.mrf.mxu0
    %v542 = vadd.f32 %v501, %v541
    %v543 = vpop.f32.mrf.mxu0
    %544 = vdwg.mxu0
    %545 = vmatprep.subr.bf16.mxu0 0
    %546 = vmatpush1.bf16.msra.mxu0 %v406
    %547 = vmatprep.subr.bf16.mxu0 0
    %548 = vmatpush1.bf16.msra.mxu0 %v405
    %549 = vmatprep.subr.bf16.mxu0 0
    %550 = vmatpush1.bf16.msra.mxu0 %v404
    %551 = vmatprep.subr.bf16.mxu0 0
    %552 = vmatpush1.bf16.msra.mxu0 %v403
    %553 = vmatprep.subr.bf16.mxu0 0
    %554 = vmatpush1.bf16.msra.mxu0 %v402
    %555 = vmatprep.subr.bf16.mxu0 0
    %556 = vmatpush1.bf16.msra.mxu0 %v401
    %557 = vmatprep.subr.bf16.mxu0 0
    %558 = vmatpush1.bf16.msra.mxu0 %v400
    %559 = vmatprep.subr.bf16.mxu0 0
    %560 = vmatpush1.bf16.msra.mxu0 %v399
    %561 = vmatprep.subr.bf16.mxu0 0
    %562 = vmatpush2.bf16.msra.mxu0 %v414
    %563 = vmatprep.subr.bf16.mxu0 0
    %564 = vmatpush2.bf16.msra.mxu0 %v413
    %565 = vmatprep.subr.bf16.mxu0 0
    %566 = vmatpush2.bf16.msra.mxu0 %v412
    %567 = vmatprep.subr.bf16.mxu0 0
    %568 = vmatpush2.bf16.msra.mxu0 %v411
    %569 = vmatprep.subr.bf16.mxu0 0
    %570 = vmatpush2.bf16.msra.mxu0 %v410
    %571 = vmatprep.subr.bf16.mxu0 0
    %572 = vmatpush2.bf16.msra.mxu0 %v409
    %573 = vmatprep.subr.bf16.mxu0 0
    %574 = vmatpush2.bf16.msra.mxu0 %v408
    %575 = vmatprep.subr.bf16.mxu0 0
    %576 = vmatpush2.bf16.msra.mxu0 %v407
    %577 = vmatprep.mubr.bf16.mxu0 %v168
    %578 = vmatmul.mubr.bf16.gmra.mxu0 %v167
    %v579 = vpop.f32.mrf.mxu0
    %v580 = vadd.f32 %v539, %v579
    %v581 = vpop.f32.mrf.mxu0
    %v582 = vpop.f32.mrf.mxu0
    %v583 = vadd.f32 %v542, %v582
    %v584 = vpop.f32.mrf.mxu0
    %585 = vdwg.mxu0
    %v586 = vadd.f32 %v41, %v580
    %v587 = vadd.f32 %v42, %v583
    %588 = vst [vmem:[#allocation2] sm:$0xff] %v586
    %589 = vst [vmem:[#allocation2 + $0x8] sm:$0xff] %v587
    // Predicated region
    $region30: #{clip_similarity_forward.1} parent=1 // pred_check
      %p590 = pneg %p35
    $region31: #{clip_similarity_forward.1} parent=1 // pred_check_branch
      %592 = sbr.rel (%p590) target = $region33
    $region32: #{clip_similarity_forward.1} parent=1 // pred_region
      %v593 = vld [vmem:[#allocation2] sm:$0xff]
      %v594 = vld [vmem:[#allocation2 + $0x8] sm:$0xff]
      %v595 = vld [vmem:[%s2] sm:$0x1]
      %v597 = vlaneseq
      %v598 = vshrl.u32 %v597, 7
      %v599 = vsub.s32 0, %v598
      %v600 = vrot.slane %v595, %v599
      %v602 = vadd.f32 %v593, %v600
      %v603 = vadd.f32 %v594, %v600
      %v604 = vmul.f32 %v602, %v602
      %v605 = vmul.f32 %v603, %v603
      %606 = vadd.xlane.f32.xlu0 %v604
      %v607 = vpop.xlane.xlu0 %606
      %608 = vadd.xlane.f32.xlu0 %v605
      %v609 = vpop.xlane.xlu0 %608
      %v610 = vmax.f32 %v607, 1e-30
      %v611 = vmax.f32 %v609, 1e-30
      %v612 = vrsqrt.pop %v610
      %v613 = vrsqrt.pop %v611
      %v614 = vmul.f32 %v602, %v612
      %v615 = vmul.f32 %v603, %v613
      %v616 = vld [vmem:[%s3] sm:$0xff]
      %v617 = vld [vmem:[%s3 + $0x8] sm:$0xff]
      %v618 = vld [vmem:[%s3 + $0x10] sm:$0xff]
      %v619 = vld [vmem:[%s3 + $0x18] sm:$0xff]
      %v620 = vld [vmem:[%s3 + $0x20] sm:$0xff]
      %v621 = vld [vmem:[%s3 + $0x28] sm:$0xff]
      %v622 = vld [vmem:[%s3 + $0x30] sm:$0xff]
      %v623 = vld [vmem:[%s3 + $0x38] sm:$0xff]
      %v624 = vld [vmem:[%s3 + $0x40] sm:$0xff]
      %v625 = vld [vmem:[%s3 + $0x48] sm:$0xff]
      %v626 = vld [vmem:[%s3 + $0x50] sm:$0xff]
      %v627 = vld [vmem:[%s3 + $0x58] sm:$0xff]
      %v628 = vld [vmem:[%s3 + $0x60] sm:$0xff]
      %v629 = vld [vmem:[%s3 + $0x68] sm:$0xff]
      %v630 = vld [vmem:[%s3 + $0x70] sm:$0xff]
      %v631 = vld [vmem:[%s3 + $0x78] sm:$0xff]
      %v632 = vld [vmem:[#allocation3] sm:$0xff]
      %v633 = vld [vmem:[#allocation3 + $0x8] sm:$0xff]
      %v634 = vld [vmem:[#allocation3 + $0x10] sm:$0xff]
      %v635 = vld [vmem:[#allocation3 + $0x18] sm:$0xff]
      %v636 = vld [vmem:[#allocation3 + $0x20] sm:$0xff]
      %v637 = vld [vmem:[#allocation3 + $0x28] sm:$0xff]
      %v638 = vld [vmem:[#allocation3 + $0x30] sm:$0xff]
      %v639 = vld [vmem:[#allocation3 + $0x38] sm:$0xff]
      %v640 = vld [vmem:[#allocation3 + $0x40] sm:$0xff]
      %v641 = vld [vmem:[#allocation3 + $0x48] sm:$0xff]
      %v642 = vld [vmem:[#allocation3 + $0x50] sm:$0xff]
      %v643 = vld [vmem:[#allocation3 + $0x58] sm:$0xff]
      %v644 = vld [vmem:[#allocation3 + $0x60] sm:$0xff]
      %v645 = vld [vmem:[#allocation3 + $0x68] sm:$0xff]
      %v646 = vld [vmem:[#allocation3 + $0x70] sm:$0xff]
      %v647 = vld [vmem:[#allocation3 + $0x78] sm:$0xff]
      %v648 = vld [vmem:[#allocation3 + $0x80] sm:$0xff]
      %v649 = vld [vmem:[#allocation3 + $0x88] sm:$0xff]
      %v650 = vld [vmem:[#allocation3 + $0x90] sm:$0xff]
      %v651 = vld [vmem:[#allocation3 + $0x98] sm:$0xff]
      %v652 = vld [vmem:[#allocation3 + $0xa0] sm:$0xff]
      %v653 = vld [vmem:[#allocation3 + $0xa8] sm:$0xff]
      %v654 = vld [vmem:[#allocation3 + $0xb0] sm:$0xff]
      %v655 = vld [vmem:[#allocation3 + $0xb8] sm:$0xff]
      %v656 = vld [vmem:[#allocation3 + $0xc0] sm:$0xff]
      %v657 = vld [vmem:[#allocation3 + $0xc8] sm:$0xff]
      %v658 = vld [vmem:[#allocation3 + $0xd0] sm:$0xff]
      %v659 = vld [vmem:[#allocation3 + $0xd8] sm:$0xff]
      %v660 = vld [vmem:[#allocation3 + $0xe0] sm:$0xff]
      %v661 = vld [vmem:[#allocation3 + $0xe8] sm:$0xff]
      %v662 = vld [vmem:[#allocation3 + $0xf0] sm:$0xff]
      %v663 = vld [vmem:[#allocation3 + $0xf8] sm:$0xff]
      %v664 = vld [vmem:[#allocation3 + $0x100] sm:$0xff]
      %v665 = vld [vmem:[#allocation3 + $0x108] sm:$0xff]
      %v666 = vld [vmem:[#allocation3 + $0x110] sm:$0xff]
      %v667 = vld [vmem:[#allocation3 + $0x118] sm:$0xff]
      %v668 = vld [vmem:[#allocation3 + $0x120] sm:$0xff]
      %v669 = vld [vmem:[#allocation3 + $0x128] sm:$0xff]
      %v670 = vld [vmem:[#allocation3 + $0x130] sm:$0xff]
      %v671 = vld [vmem:[#allocation3 + $0x138] sm:$0xff]
      %v672 = vld [vmem:[#allocation3 + $0x140] sm:$0xff]
      %v673 = vld [vmem:[#allocation3 + $0x148] sm:$0xff]
      %v674 = vld [vmem:[#allocation3 + $0x150] sm:$0xff]
      %v675 = vld [vmem:[#allocation3 + $0x158] sm:$0xff]
      %v676 = vld [vmem:[#allocation3 + $0x160] sm:$0xff]
      %v677 = vld [vmem:[#allocation3 + $0x168] sm:$0xff]
      %v678 = vld [vmem:[#allocation3 + $0x170] sm:$0xff]
      %v679 = vld [vmem:[#allocation3 + $0x178] sm:$0xff]
      %v680 = vld [vmem:[#allocation3 + $0x180] sm:$0xff]
      %v681 = vld [vmem:[#allocation3 + $0x188] sm:$0xff]
      %v682 = vld [vmem:[#allocation3 + $0x190] sm:$0xff]
      %v683 = vld [vmem:[#allocation3 + $0x198] sm:$0xff]
      %v684 = vld [vmem:[#allocation3 + $0x1a0] sm:$0xff]
      %v685 = vld [vmem:[#allocation3 + $0x1a8] sm:$0xff]
      %v686 = vld [vmem:[#allocation3 + $0x1b0] sm:$0xff]
      %v687 = vld [vmem:[#allocation3 + $0x1b8] sm:$0xff]
      %v688 = vld [vmem:[#allocation3 + $0x1c0] sm:$0xff]
      %v689 = vld [vmem:[#allocation3 + $0x1c8] sm:$0xff]
      %v690 = vld [vmem:[#allocation3 + $0x1d0] sm:$0xff]
      %v691 = vld [vmem:[#allocation3 + $0x1d8] sm:$0xff]
      %v692 = vld [vmem:[#allocation3 + $0x1e0] sm:$0xff]
      %v693 = vld [vmem:[#allocation3 + $0x1e8] sm:$0xff]
      %v694 = vld [vmem:[#allocation3 + $0x1f0] sm:$0xff]
      %v695 = vld [vmem:[#allocation3 + $0x1f8] sm:$0xff]
      %v696 = vld [vmem:[#allocation3 + $0x200] sm:$0xff]
      %v697 = vld [vmem:[#allocation3 + $0x208] sm:$0xff]
      %v698 = vld [vmem:[#allocation3 + $0x210] sm:$0xff]
      %v699 = vld [vmem:[#allocation3 + $0x218] sm:$0xff]
      %v700 = vld [vmem:[#allocation3 + $0x220] sm:$0xff]
      %v701 = vld [vmem:[#allocation3 + $0x228] sm:$0xff]
      %v702 = vld [vmem:[#allocation3 + $0x230] sm:$0xff]
      %v703 = vld [vmem:[#allocation3 + $0x238] sm:$0xff]
      %v704 = vld [vmem:[#allocation3 + $0x240] sm:$0xff]
      %v705 = vld [vmem:[#allocation3 + $0x248] sm:$0xff]
      %v706 = vld [vmem:[#allocation3 + $0x250] sm:$0xff]
      %v707 = vld [vmem:[#allocation3 + $0x258] sm:$0xff]
      %v708 = vld [vmem:[#allocation3 + $0x260] sm:$0xff]
      %v709 = vld [vmem:[#allocation3 + $0x268] sm:$0xff]
      %v710 = vld [vmem:[#allocation3 + $0x270] sm:$0xff]
      %v711 = vld [vmem:[#allocation3 + $0x278] sm:$0xff]
      %v712 = vld [vmem:[#allocation3 + $0x280] sm:$0xff]
      %v713 = vld [vmem:[#allocation3 + $0x288] sm:$0xff]
      %v714 = vld [vmem:[#allocation3 + $0x290] sm:$0xff]
      %v715 = vld [vmem:[#allocation3 + $0x298] sm:$0xff]
      %v716 = vld [vmem:[#allocation3 + $0x2a0] sm:$0xff]
      %v717 = vld [vmem:[#allocation3 + $0x2a8] sm:$0xff]
      %v718 = vld [vmem:[#allocation3 + $0x2b0] sm:$0xff]
      %v719 = vld [vmem:[#allocation3 + $0x2b8] sm:$0xff]
      %v720 = vld [vmem:[#allocation3 + $0x2c0] sm:$0xff]
      %v721 = vld [vmem:[#allocation3 + $0x2c8] sm:$0xff]
      %v722 = vld [vmem:[#allocation3 + $0x2d0] sm:$0xff]
      %v723 = vld [vmem:[#allocation3 + $0x2d8] sm:$0xff]
      %v724 = vld [vmem:[#allocation3 + $0x2e0] sm:$0xff]
      %v725 = vld [vmem:[#allocation3 + $0x2e8] sm:$0xff]
      %v726 = vld [vmem:[#allocation3 + $0x2f0] sm:$0xff]
      %v727 = vld [vmem:[#allocation3 + $0x2f8] sm:$0xff]
      %v728 = vld [vmem:[#allocation3 + $0x300] sm:$0xff]
      %v729 = vld [vmem:[#allocation3 + $0x308] sm:$0xff]
      %v730 = vld [vmem:[#allocation3 + $0x310] sm:$0xff]
      %v731 = vld [vmem:[#allocation3 + $0x318] sm:$0xff]
      %v732 = vld [vmem:[#allocation3 + $0x320] sm:$0xff]
      %v733 = vld [vmem:[#allocation3 + $0x328] sm:$0xff]
      %v734 = vld [vmem:[#allocation3 + $0x330] sm:$0xff]
      %v735 = vld [vmem:[#allocation3 + $0x338] sm:$0xff]
      %v736 = vld [vmem:[#allocation3 + $0x340] sm:$0xff]
      %v737 = vld [vmem:[#allocation3 + $0x348] sm:$0xff]
      %v738 = vld [vmem:[#allocation3 + $0x350] sm:$0xff]
      %v739 = vld [vmem:[#allocation3 + $0x358] sm:$0xff]
      %v740 = vld [vmem:[#allocation3 + $0x360] sm:$0xff]
      %v741 = vld [vmem:[#allocation3 + $0x368] sm:$0xff]
      %v742 = vld [vmem:[#allocation3 + $0x370] sm:$0xff]
      %v743 = vld [vmem:[#allocation3 + $0x378] sm:$0xff]
      %v744 = vld [vmem:[#allocation3 + $0x380] sm:$0xff]
      %v745 = vld [vmem:[#allocation3 + $0x388] sm:$0xff]
      %v746 = vld [vmem:[#allocation3 + $0x390] sm:$0xff]
      %v747 = vld [vmem:[#allocation3 + $0x398] sm:$0xff]
      %v748 = vld [vmem:[#allocation3 + $0x3a0] sm:$0xff]
      %v749 = vld [vmem:[#allocation3 + $0x3a8] sm:$0xff]
      %v750 = vld [vmem:[#allocation3 + $0x3b0] sm:$0xff]
      %v751 = vld [vmem:[#allocation3 + $0x3b8] sm:$0xff]
      %v752 = vld [vmem:[#allocation3 + $0x3c0] sm:$0xff]
      %v753 = vld [vmem:[#allocation3 + $0x3c8] sm:$0xff]
      %v754 = vld [vmem:[#allocation3 + $0x3d0] sm:$0xff]
      %v755 = vld [vmem:[#allocation3 + $0x3d8] sm:$0xff]
      %v756 = vld [vmem:[#allocation3 + $0x3e0] sm:$0xff]
      %v757 = vld [vmem:[#allocation3 + $0x3e8] sm:$0xff]
      %v758 = vld [vmem:[#allocation3 + $0x3f0] sm:$0xff]
      %v759 = vld [vmem:[#allocation3 + $0x3f8] sm:$0xff]
      %760 = vmatprep.subr.mxu0 0.0
      %761 = vmatpush1.msra.mxu0 %v647
      %762 = vmatprep.subr.mxu0 0.0
      %763 = vmatpush1.msra.mxu0 %v646
      %764 = vmatprep.subr.mxu0 0.0
      %765 = vmatpush1.msra.mxu0 %v645
      %766 = vmatprep.subr.mxu0 0.0
      %767 = vmatpush1.msra.mxu0 %v644
      %768 = vmatprep.subr.mxu0 0.0
      %769 = vmatpush1.msra.mxu0 %v643
      %770 = vmatprep.subr.mxu0 0.0
      %771 = vmatpush1.msra.mxu0 %v642
      %772 = vmatprep.subr.mxu0 0.0
      %773 = vmatpush1.msra.mxu0 %v641
      %774 = vmatprep.subr.mxu0 0.0
      %775 = vmatpush1.msra.mxu0 %v640
      %776 = vmatprep.subr.mxu0 0.0
      %777 = vmatpush1.msra.mxu0 %v639
      %778 = vmatprep.subr.mxu0 0.0
      %779 = vmatpush1.msra.mxu0 %v638
      %780 = vmatprep.subr.mxu0 0.0
      %781 = vmatpush1.msra.mxu0 %v637
      %782 = vmatprep.subr.mxu0 0.0
      %783 = vmatpush1.msra.mxu0 %v636
      %784 = vmatprep.subr.mxu0 0.0
      %785 = vmatpush1.msra.mxu0 %v635
      %786 = vmatprep.subr.mxu0 0.0
      %787 = vmatpush1.msra.mxu0 %v634
      %788 = vmatprep.subr.mxu0 0.0
      %789 = vmatpush1.msra.mxu0 %v633
      %790 = vmatprep.subr.mxu0 0.0
      %791 = vmatpush1.msra.mxu0 %v632
      %792 = vmatprep.subr.mxu0 0.0
      %793 = vmatpush2.msra.mxu0 %v663
      %794 = vmatprep.subr.mxu0 0.0
      %795 = vmatpush2.msra.mxu0 %v662
      %796 = vmatprep.subr.mxu0 0.0
      %797 = vmatpush2.msra.mxu0 %v661
      %798 = vmatprep.subr.mxu0 0.0
      %799 = vmatpush2.msra.mxu0 %v660
      %800 = vmatprep.subr.mxu0 0.0
      %801 = vmatpush2.msra.mxu0 %v659
      %802 = vmatprep.subr.mxu0 0.0
      %803 = vmatpush2.msra.mxu0 %v658
      %804 = vmatprep.subr.mxu0 0.0
      %805 = vmatpush2.msra.mxu0 %v657
      %806 = vmatprep.subr.mxu0 0.0
      %807 = vmatpush2.msra.mxu0 %v656
      %808 = vmatprep.subr.mxu0 0.0
      %809 = vmatpush2.msra.mxu0 %v655
      %810 = vmatprep.subr.mxu0 0.0
      %811 = vmatpush2.msra.mxu0 %v654
      %812 = vmatprep.subr.mxu0 0.0
      %813 = vmatpush2.msra.mxu0 %v653
      %814 = vmatprep.subr.mxu0 0.0
      %815 = vmatpush2.msra.mxu0 %v652
      %816 = vmatprep.subr.mxu0 0.0
      %817 = vmatpush2.msra.mxu0 %v651
      %818 = vmatprep.subr.mxu0 0.0
      %819 = vmatpush2.msra.mxu0 %v650
      %820 = vmatprep.subr.mxu0 0.0
      %821 = vmatpush2.msra.mxu0 %v649
      %822 = vmatprep.subr.mxu0 0.0
      %823 = vmatpush2.msra.mxu0 %v648
      %824 = vmatprep.mubr.f32.mxu0 %v617
      %825 = vmatmul.mubr.f32.gmra.mxu0 %v616
      %v826 = vpop.f32.mrf.mxu0
      %v827 = vadd.f32 0.0, %v826
      %v828 = vpop.f32.mrf.mxu0
      %829 = vmatprep.mubr.f32.mxu0 %v625
      %830 = vmatmul.mubr.f32.gmra.mxu0 %v624
      %v831 = vpop.f32.mrf.mxu0
      %v832 = vadd.f32 0.0, %v831
      %v833 = vpop.f32.mrf.mxu0
      %834 = vdwg.mxu0
      %835 = vmatprep.subr.mxu0 0.0
      %836 = vmatpush1.msra.mxu0 %v679
      %837 = vmatprep.subr.mxu0 0.0
      %838 = vmatpush1.msra.mxu0 %v678
      %839 = vmatprep.subr.mxu0 0.0
      %840 = vmatpush1.msra.mxu0 %v677
      %841 = vmatprep.subr.mxu0 0.0
      %842 = vmatpush1.msra.mxu0 %v676
      %843 = vmatprep.subr.mxu0 0.0
      %844 = vmatpush1.msra.mxu0 %v675
      %845 = vmatprep.subr.mxu0 0.0
      %846 = vmatpush1.msra.mxu0 %v674
      %847 = vmatprep.subr.mxu0 0.0
      %848 = vmatpush1.msra.mxu0 %v673
      %849 = vmatprep.subr.mxu0 0.0
      %850 = vmatpush1.msra.mxu0 %v672
      %851 = vmatprep.subr.mxu0 0.0
      %852 = vmatpush1.msra.mxu0 %v671
      %853 = vmatprep.subr.mxu0 0.0
      %854 = vmatpush1.msra.mxu0 %v670
      %855 = vmatprep.subr.mxu0 0.0
      %856 = vmatpush1.msra.mxu0 %v669
      %857 = vmatprep.subr.mxu0 0.0
      %858 = vmatpush1.msra.mxu0 %v668
      %859 = vmatprep.subr.mxu0 0.0
      %860 = vmatpush1.msra.mxu0 %v667
      %861 = vmatprep.subr.mxu0 0.0
      %862 = vmatpush1.msra.mxu0 %v666
      %863 = vmatprep.subr.mxu0 0.0
      %864 = vmatpush1.msra.mxu0 %v665
      %865 = vmatprep.subr.mxu0 0.0
      %866 = vmatpush1.msra.mxu0 %v664
      %867 = vmatprep.subr.mxu0 0.0
      %868 = vmatpush2.msra.mxu0 %v695
      %869 = vmatprep.subr.mxu0 0.0
      %870 = vmatpush2.msra.mxu0 %v694
      %871 = vmatprep.subr.mxu0 0.0
      %872 = vmatpush2.msra.mxu0 %v693
      %873 = vmatprep.subr.mxu0 0.0
      %874 = vmatpush2.msra.mxu0 %v692
      %875 = vmatprep.subr.mxu0 0.0
      %876 = vmatpush2.msra.mxu0 %v691
      %877 = vmatprep.subr.mxu0 0.0
      %878 = vmatpush2.msra.mxu0 %v690
      %879 = vmatprep.subr.mxu0 0.0
      %880 = vmatpush2.msra.mxu0 %v689
      %881 = vmatprep.subr.mxu0 0.0
      %882 = vmatpush2.msra.mxu0 %v688
      %883 = vmatprep.subr.mxu0 0.0
      %884 = vmatpush2.msra.mxu0 %v687
      %885 = vmatprep.subr.mxu0 0.0
      %886 = vmatpush2.msra.mxu0 %v686
      %887 = vmatprep.subr.mxu0 0.0
      %888 = vmatpush2.msra.mxu0 %v685
      %889 = vmatprep.subr.mxu0 0.0
      %890 = vmatpush2.msra.mxu0 %v684
      %891 = vmatprep.subr.mxu0 0.0
      %892 = vmatpush2.msra.mxu0 %v683
      %893 = vmatprep.subr.mxu0 0.0
      %894 = vmatpush2.msra.mxu0 %v682
      %895 = vmatprep.subr.mxu0 0.0
      %896 = vmatpush2.msra.mxu0 %v681
      %897 = vmatprep.subr.mxu0 0.0
      %898 = vmatpush2.msra.mxu0 %v680
      %899 = vmatprep.mubr.f32.mxu0 %v619
      %900 = vmatmul.mubr.f32.gmra.mxu0 %v618
      %v901 = vpop.f32.mrf.mxu0
      %v902 = vadd.f32 %v827, %v901
      %v903 = vpop.f32.mrf.mxu0
      %904 = vmatprep.mubr.f32.mxu0 %v627
      %905 = vmatmul.mubr.f32.gmra.mxu0 %v626
      %v906 = vpop.f32.mrf.mxu0
      %v907 = vadd.f32 %v832, %v906
      %v908 = vpop.f32.mrf.mxu0
      %909 = vdwg.mxu0
      %910 = vmatprep.subr.mxu0 0.0
      %911 = vmatpush1.msra.mxu0 %v711
      %912 = vmatprep.subr.mxu0 0.0
      %913 = vmatpush1.msra.mxu0 %v710
      %914 = vmatprep.subr.mxu0 0.0
      %915 = vmatpush1.msra.mxu0 %v709
      %916 = vmatprep.subr.mxu0 0.0
      %917 = vmatpush1.msra.mxu0 %v708
      %918 = vmatprep.subr.mxu0 0.0
      %919 = vmatpush1.msra.mxu0 %v707
      %920 = vmatprep.subr.mxu0 0.0
      %921 = vmatpush1.msra.mxu0 %v706
      %922 = vmatprep.subr.mxu0 0.0
      %923 = vmatpush1.msra.mxu0 %v705
      %924 = vmatprep.subr.mxu0 0.0
      %925 = vmatpush1.msra.mxu0 %v704
      %926 = vmatprep.subr.mxu0 0.0
      %927 = vmatpush1.msra.mxu0 %v703
      %928 = vmatprep.subr.mxu0 0.0
      %929 = vmatpush1.msra.mxu0 %v702
      %930 = vmatprep.subr.mxu0 0.0
      %931 = vmatpush1.msra.mxu0 %v701
      %932 = vmatprep.subr.mxu0 0.0
      %933 = vmatpush1.msra.mxu0 %v700
      %934 = vmatprep.subr.mxu0 0.0
      %935 = vmatpush1.msra.mxu0 %v699
      %936 = vmatprep.subr.mxu0 0.0
      %937 = vmatpush1.msra.mxu0 %v698
      %938 = vmatprep.subr.mxu0 0.0
      %939 = vmatpush1.msra.mxu0 %v697
      %940 = vmatprep.subr.mxu0 0.0
      %941 = vmatpush1.msra.mxu0 %v696
      %942 = vmatprep.subr.mxu0 0.0
      %943 = vmatpush2.msra.mxu0 %v727
      %944 = vmatprep.subr.mxu0 0.0
      %945 = vmatpush2.msra.mxu0 %v726
      %946 = vmatprep.subr.mxu0 0.0
      %947 = vmatpush2.msra.mxu0 %v725
      %948 = vmatprep.subr.mxu0 0.0
      %949 = vmatpush2.msra.mxu0 %v724
      %950 = vmatprep.subr.mxu0 0.0
      %951 = vmatpush2.msra.mxu0 %v723
      %952 = vmatprep.subr.mxu0 0.0
      %953 = vmatpush2.msra.mxu0 %v722
      %954 = vmatprep.subr.mxu0 0.0
      %955 = vmatpush2.msra.mxu0 %v721
      %956 = vmatprep.subr.mxu0 0.0
      %957 = vmatpush2.msra.mxu0 %v720
      %958 = vmatprep.subr.mxu0 0.0
      %959 = vmatpush2.msra.mxu0 %v719
      %960 = vmatprep.subr.mxu0 0.0
      %961 = vmatpush2.msra.mxu0 %v718
      %962 = vmatprep.subr.mxu0 0.0
      %963 = vmatpush2.msra.mxu0 %v717
      %964 = vmatprep.subr.mxu0 0.0
      %965 = vmatpush2.msra.mxu0 %v716
      %966 = vmatprep.subr.mxu0 0.0
      %967 = vmatpush2.msra.mxu0 %v715
      %968 = vmatprep.subr.mxu0 0.0
      %969 = vmatpush2.msra.mxu0 %v714
      %970 = vmatprep.subr.mxu0 0.0
      %971 = vmatpush2.msra.mxu0 %v713
      %972 = vmatprep.subr.mxu0 0.0
      %973 = vmatpush2.msra.mxu0 %v712
      %974 = vmatprep.mubr.f32.mxu0 %v621
      %975 = vmatmul.mubr.f32.gmra.mxu0 %v620
      %v976 = vpop.f32.mrf.mxu0
      %v977 = vadd.f32 %v902, %v976
      %v978 = vpop.f32.mrf.mxu0
      %979 = vmatprep.mubr.f32.mxu0 %v629
      %980 = vmatmul.mubr.f32.gmra.mxu0 %v628
      %v981 = vpop.f32.mrf.mxu0
      %v982 = vadd.f32 %v907, %v981
      %v983 = vpop.f32.mrf.mxu0
      %984 = vdwg.mxu0
      %985 = vmatprep.subr.mxu0 0.0
      %986 = vmatpush1.msra.mxu0 %v743
      %987 = vmatprep.subr.mxu0 0.0
      %988 = vmatpush1.msra.mxu0 %v742
      %989 = vmatprep.subr.mxu0 0.0
      %990 = vmatpush1.msra.mxu0 %v741
      %991 = vmatprep.subr.mxu0 0.0
      %992 = vmatpush1.msra.mxu0 %v740
      %993 = vmatprep.subr.mxu0 0.0
      %994 = vmatpush1.msra.mxu0 %v739
      %995 = vmatprep.subr.mxu0 0.0
      %996 = vmatpush1.msra.mxu0 %v738
      %997 = vmatprep.subr.mxu0 0.0
      %998 = vmatpush1.msra.mxu0 %v737
      %999 = vmatprep.subr.mxu0 0.0
      %1000 = vmatpush1.msra.mxu0 %v736
      %1001 = vmatprep.subr.mxu0 0.0
      %1002 = vmatpush1.msra.mxu0 %v735
      %1003 = vmatprep.subr.mxu0 0.0
      %1004 = vmatpush1.msra.mxu0 %v734
      %1005 = vmatprep.subr.mxu0 0.0
      %1006 = vmatpush1.msra.mxu0 %v733
      %1007 = vmatprep.subr.mxu0 0.0
      %1008 = vmatpush1.msra.mxu0 %v732
      %1009 = vmatprep.subr.mxu0 0.0
      %1010 = vmatpush1.msra.mxu0 %v731
      %1011 = vmatprep.subr.mxu0 0.0
      %1012 = vmatpush1.msra.mxu0 %v730
      %1013 = vmatprep.subr.mxu0 0.0
      %1014 = vmatpush1.msra.mxu0 %v729
      %1015 = vmatprep.subr.mxu0 0.0
      %1016 = vmatpush1.msra.mxu0 %v728
      %1017 = vmatprep.subr.mxu0 0.0
      %1018 = vmatpush2.msra.mxu0 %v759
      %1019 = vmatprep.subr.mxu0 0.0
      %1020 = vmatpush2.msra.mxu0 %v758
      %1021 = vmatprep.subr.mxu0 0.0
      %1022 = vmatpush2.msra.mxu0 %v757
      %1023 = vmatprep.subr.mxu0 0.0
      %1024 = vmatpush2.msra.mxu0 %v756
      %1025 = vmatprep.subr.mxu0 0.0
      %1026 = vmatpush2.msra.mxu0 %v755
      %1027 = vmatprep.subr.mxu0 0.0
      %1028 = vmatpush2.msra.mxu0 %v754
      %1029 = vmatprep.subr.mxu0 0.0
      %1030 = vmatpush2.msra.mxu0 %v753
      %1031 = vmatprep.subr.mxu0 0.0
      %1032 = vmatpush2.msra.mxu0 %v752
      %1033 = vmatprep.subr.mxu0 0.0
      %1034 = vmatpush2.msra.mxu0 %v751
      %1035 = vmatprep.subr.mxu0 0.0
      %1036 = vmatpush2.msra.mxu0 %v750
      %1037 = vmatprep.subr.mxu0 0.0
      %1038 = vmatpush2.msra.mxu0 %v749
      %1039 = vmatprep.subr.mxu0 0.0
      %1040 = vmatpush2.msra.mxu0 %v748
      %1041 = vmatprep.subr.mxu0 0.0
      %1042 = vmatpush2.msra.mxu0 %v747
      %1043 = vmatprep.subr.mxu0 0.0
      %1044 = vmatpush2.msra.mxu0 %v746
      %1045 = vmatprep.subr.mxu0 0.0
      %1046 = vmatpush2.msra.mxu0 %v745
      %1047 = vmatprep.subr.mxu0 0.0
      %1048 = vmatpush2.msra.mxu0 %v744
      %1049 = vmatprep.mubr.f32.mxu0 %v623
      %1050 = vmatmul.mubr.f32.gmra.mxu0 %v622
      %v1051 = vpop.f32.mrf.mxu0
      %v1052 = vadd.f32 %v977, %v1051
      %v1053 = vpop.f32.mrf.mxu0
      %1054 = vmatprep.mubr.f32.mxu0 %v631
      %1055 = vmatmul.mubr.f32.gmra.mxu0 %v630
      %v1056 = vpop.f32.mrf.mxu0
      %v1057 = vadd.f32 %v982, %v1056
      %v1058 = vpop.f32.mrf.mxu0
      %1059 = vdwg.mxu0
      %v1060 = vmul.f32 %v1052, %v1052
      %v1061 = vmul.f32 %v1057, %v1057
      %1062 = vadd.xlane.f32.xlu0 %v1060
      %v1063 = vpop.xlane.xlu0 %1062
      %1064 = vadd.xlane.f32.xlu0 %v1061
      %v1065 = vpop.xlane.xlu0 %1064
      %v1066 = vmax.f32 %v1063, 1e-30
      %v1067 = vmax.f32 %v1065, 1e-30
      %v1068 = vrsqrt.pop %v1066
      %v1069 = vrsqrt.pop %v1067
      %v1070 = vmul.f32 %v1052, %v1068
      %v1071 = vmul.f32 %v1057, %v1069
      %v1072 = vsub.f32 %v615, %v614
      %v1073 = vsub.f32 %v1071, %v1070
      %v1074 = vmul.f32 %v614, %v614
      %1075 = vadd.xlane.f32.xlu0 %v1074
      %v1076 = vpop.xlane.xlu0 %1075
      %v1077 = vmax.f32 %v1076, 1e-16
      %v1078 = vrsqrt.pop %v1077
      %v1079 = vmul.f32 %v615, %v615
      %1080 = vadd.xlane.f32.xlu0 %v1079
      %v1081 = vpop.xlane.xlu0 %1080
      %v1082 = vmax.f32 %v1081, 1e-16
      %v1083 = vrsqrt.pop %v1082
      %v1084 = vmul.f32 %v1070, %v1070
      %1085 = vadd.xlane.f32.xlu0 %v1084
      %v1086 = vpop.xlane.xlu0 %1085
      %v1087 = vmax.f32 %v1086, 1e-16
      %v1088 = vrsqrt.pop %v1087
      %v1089 = vmul.f32 %v1071, %v1071
      %1090 = vadd.xlane.f32.xlu0 %v1089
      %v1091 = vpop.xlane.xlu0 %1090
      %v1092 = vmax.f32 %v1091, 1e-16
      %v1093 = vrsqrt.pop %v1092
      %v1094 = vmul.f32 %v1072, %v1072
      %1095 = vadd.xlane.f32.xlu0 %v1094
      %v1096 = vpop.xlane.xlu0 %1095
      %v1097 = vmax.f32 %v1096, 1e-16
      %v1098 = vrsqrt.pop %v1097
      %v1099 = vmul.f32 %v1073, %v1073
      %1100 = vadd.xlane.f32.xlu0 %v1099
      %v1101 = vpop.xlane.xlu0 %1100
      %v1102 = vmax.f32 %v1101, 1e-16
      %v1103 = vrsqrt.pop %v1102
      %v1104 = vmul.f32 %v614, %v1070
      %1105 = vadd.xlane.f32.xlu0 %v1104
      %v1106 = vpop.xlane.xlu0 %1105
      %v1107 = vmul.f32 %v1106, %v1078
      %v1108 = vmul.f32 %v1107, %v1088
      %v1109 = vmul.f32 %v615, %v1071
      %1110 = vadd.xlane.f32.xlu0 %v1109
      %v1111 = vpop.xlane.xlu0 %1110
      %v1112 = vmul.f32 %v1111, %v1083
      %v1113 = vmul.f32 %v1112, %v1093
      %v1114 = vmul.f32 %v1072, %v1073
      %1115 = vadd.xlane.f32.xlu0 %v1114
      %v1116 = vpop.xlane.xlu0 %1115
      %v1117 = vmul.f32 %v1116, %v1098
      %v1118 = vmul.f32 %v1117, %v1103
      %v1119 = vmul.f32 %v614, %v615
      %1120 = vadd.xlane.f32.xlu0 %v1119
      %v1121 = vpop.xlane.xlu0 %1120
      %v1122 = vmul.f32 %v1121, %v1078
      %v1123 = vmul.f32 %v1122, %v1083
      %v1124 = vlaneseq
      %v1125 = vand.u32 %v1124, 127
      %vm1126 = vcmp.eq.s32.totalorder %v1125, 0
      %v1127 = vsel %vm1126, %v1108, 0.0
      %vm1128 = vcmp.eq.s32.totalorder %v1125, 1
      %v1129 = vsel %vm1128, %v1113, 0.0
      %v1130 = vadd.f32 %v1127, %v1129
      %vm1131 = vcmp.eq.s32.totalorder %v1125, 2
      %v1132 = vsel %vm1131, %v1118, 0.0
      %v1133 = vadd.f32 %v1130, %v1132
      %vm1134 = vcmp.eq.s32.totalorder %v1125, 3
      %v1135 = vsel %vm1134, %v1123, 0.0
      %v1136 = vadd.f32 %v1133, %v1135
      %1137 = vst [vmem:[%s5] sm:$0xff] %v1136
    $region33: #{clip_similarity_forward.1} parent=1 // pred_fallthru
      _
    // Predicated region
    $region34: #{clip_similarity_forward.1} parent=1 // pred_check
      _
    $region35: #{clip_similarity_forward.1} parent=1 // pred_check_branch
      %1139 = sbr.rel (0) target = $region37
    $region36: #{clip_similarity_forward.1} parent=1 // pred_region
      _
    $region37: #{clip_similarity_forward.1} parent=1 // pred_fallthru
      _
    // Predicated region
    $region38: #{clip_similarity_forward.1} parent=1 // pred_check
      _
    $region39: #{clip_similarity_forward.1} parent=1 // pred_check_branch
      %1141 = sbr.rel (0) target = $region41
    $region40: #{clip_similarity_forward.1} parent=1 // pred_region
      _
    $region41: #{clip_similarity_forward.1} parent=1 // pred_fallthru
      _
    %1142 = vsyncpa [#allocation4], 1

</llo_original>
